<compile_context>
chip_gen: v6e
topology: v6e:2x2x1
jax: 0.10.0
libtpu: 0.0.40
codegen_flags: <defaults>
</compile_context>

<pallas_src>
from functools import partial

import jax
import jax.numpy as jnp
import numpy as np
from jax.experimental import pallas as pl
from jax.experimental.pallas import tpu as pltpu


def _shift_crop_kernel(offs_ref, xp_ref, out_ref, *, n_imgs):
    """Integer-shift crop of replicate-padded images.

    offs_ref: SMEM int32 (2*n_imgs,) = row shifts [0:n] then col shifts [n:2n], each in [0, 2*pad].
    xp_ref  : VMEM (b_blk, c, H, H) replicate-padded images, H = h + 2*pad.
    out_ref : VMEM (b_blk, c, h, w).
    """
    blk = pl.program_id(0)
    b_blk, c, h, w = out_ref.shape
    Hp = xp_ref.shape[2]
    ragged = (n_imgs % b_blk) != 0

    # One-hot column-selection iotas, hoisted out of the image loop
    # (JAX does not CSE broadcast_in_dim).
    src = jax.lax.broadcasted_iota(jnp.int32, (c, Hp, w), 1)
    dst = jax.lax.broadcasted_iota(jnp.int32, (c, Hp, w), 2)

    for i in range(b_blk):                       # static unroll; b_blk kept small (<= 8)
        g = blk * b_blk + i                      # global image index
        if ragged:
            g = jnp.minimum(g, n_imgs - 1)       # tail block: OOB output rows are dropped anyway
        ys = offs_ref[g]                         # row shift in [0, 2*pad]
        xs = offs_ref[n_imgs + g]                # col shift in [0, 2*pad]

        # Row shift: dynamic start on the sublane axis only, full lanes.
        rows = xp_ref[i, :, pl.ds(ys, h), :]                       # (c, h, Hp)
        # Column shift: one-hot selection matrix, contracted on the (idle) MXU.
        sel = jnp.where(src == dst + xs, 1.0, 0.0).astype(rows.dtype)   # (c, Hp, w), exact 0/1
        res = jnp.einsum("chy,cyw->chw", rows, sel,
                         preferred_element_type=jnp.float32)        # exact: single nonzero tap
        out_ref[i] = res.astype(out_ref.dtype)                      # unconditional store


def _tile_rounded_slab_bytes(c, rows, cols, dtype):
    """Bytes of a (c, rows, cols) VMEM slab with (8,128)/(16,128)/(32,128) tile rounding."""
    item = jnp.dtype(dtype).itemsize
    sub = {4: 8, 2: 16, 1: 32}.get(item, 8)
    r = -(-rows // sub) * sub
    l = -(-cols // 128) * 128
    return c * r * l * item


def _pick_batch_block(n, per_img_bytes, vmem_budget_bytes, max_batch_block, min_grid_steps=4):
    """Largest batch block that fits the VMEM budget and keeps >= min(n, min_grid_steps) steps."""
    cap_vmem = max(1, vmem_budget_bytes // max(per_img_bytes, 1))
    cap_steps = max(1, n // min(n, min_grid_steps)) if n > 1 else 1
    return int(max(1, min(max_batch_block, cap_vmem, cap_steps)))


def random_shifts_aug(x, key, pad=4, vmem_budget_bytes=16 << 20, max_batch_block=8):
    """JAX/Pallas port of RandomShiftsAug.forward.  x: NCHW (n,c,h,w) or CHW.

    vmem_budget_bytes / max_batch_block are per-generation knobs: the 16 MiB default is safe
    on v5e/v6e/v7x; raise to ~32-48 MiB (and max_batch_block to 16-32) on v6e.
    """
    if x.ndim == 3:
        x = x[None]
    elif x.ndim != 4:
        raise ValueError(f"bad input shape: {x.shape}")
    n, c, h, w = x.shape
    assert h == w, f"expected square images, got {h}x{w}"
    Hp = h + 2 * pad

    # torch.nn.functional.pad(..., 'replicate') -- the only wrapper-side pass.
    xp = jnp.pad(x, ((0, 0), (0, 0), (pad, pad), (pad, pad)), mode="edge")

    # torch: shift = randint(0, 2*pad+1, (n,1,1,2)); grid = base + 2*shift/Hp.  With
    # align_corners=False the sample coordinate is exactly (i + sy, j + sx): an integer crop of
    # the padded image; padding_mode='zeros' never triggers and the bilinear blend degenerates.
    # TODO(synk): torch.randint's RNG stream is not reproducible in JAX; jax.random.randint with
    # the caller-provided key has the same distribution/semantics.
    shift_int = jax.random.randint(key, (n, 2), 0, 2 * pad + 1)   # [:,0]=x(col), [:,1]=y(row)
    offs = jnp.concatenate([shift_int[:, 1], shift_int[:, 0]]).astype(jnp.int32)   # (2n,)

    # Tile-rounded, double-buffered (in + out) bytes per image.
    per_img = 2 * (_tile_rounded_slab_bytes(c, Hp, Hp, x.dtype)
                   + _tile_rounded_slab_bytes(c, h, w, x.dtype))
    b_blk = _pick_batch_block(n, per_img, vmem_budget_bytes, max_batch_block)
    num_blocks = int(pl.cdiv(n, b_blk))
    vmem_limit = int(max(16 << 20, b_blk * per_img + (4 << 20)))

    grid_spec = pltpu.PrefetchScalarGridSpec(
        num_scalar_prefetch=1,                   # offs -> SMEM, visible to kernel & index maps
        grid=(num_blocks,),
        in_specs=[pl.BlockSpec((b_blk, c, Hp, Hp), lambda b, offs: (b, 0, 0, 0))],
        out_specs=pl.BlockSpec((b_blk, c, h, w), lambda b, offs: (b, 0, 0, 0)),
    )
    out = pl.pallas_call(
        partial(_shift_crop_kernel, n_imgs=n),
        out_shape=jax.ShapeDtypeStruct((n, c, h, w), x.dtype),
        grid_spec=grid_spec,
        compiler_params=pltpu.CompilerParams(
            dimension_semantics=("parallel",),   # images independent -> v7x megacore split
            vmem_limit_bytes=vmem_limit,
        ),
    )(offs, xp)

    if n == 1:
        # Reproduce the torch module: it squeezes dim 0 whenever n == 1 (after the pad, x is
        # always 4-D, so that branch always fires for n == 1).
        out = out[0]
    return out


if __name__ == "__main__":
    key = jax.random.PRNGKey(0)
    xkey, skey = jax.random.split(key)
    n, c, h, w = 2, 4, 16, 16
    pad = 4

    x = jax.random.normal(xkey, (n, c, h, w), dtype=jnp.float32)

    out = jax.block_until_ready(random_shifts_aug(x, skey, pad=pad))

    # Reference: the random shift is an exact integer translation of the replicate-padded image,
    # so grid_sample reduces to an integer-offset crop.
    shift_int = np.asarray(jax.random.randint(skey, (n, 2), 0, 2 * pad + 1))
    xp = np.asarray(jnp.pad(x, ((0, 0), (0, 0), (pad, pad), (pad, pad)), mode="edge"))
    ref = np.stack([
        xp[i, :, shift_int[i, 1]:shift_int[i, 1] + h,
                 shift_int[i, 0]:shift_int[i, 0] + w]
        for i in range(n)
    ])
    np.testing.assert_allclose(np.asarray(out), ref, atol=1e-5, rtol=1e-5)
    assert out.shape == (n, c, h, w) and out.dtype == x.dtype
    print("KERNEL_OK")
</pallas_src>

<mosaic_0001>
module attributes {stable_mosaic.version = 11 : i64} {
  func.func @_shift_crop_kernel(%arg0: i32, %arg1: memref<4xi32, #tpu.memory_space<smem>>, %arg2: memref<1x4x24x24xf32, #tpu.memory_space<vmem>>, %arg3: memref<1x4x16x16xf32, #tpu.memory_space<vmem>>) attributes {dimension_semantics = [#tpu.dimension_semantics<parallel>], iteration_bounds = array<i64: 2>, scalar_prefetch = 1 : i64, scratch_operands = 0 : i64, tpu.core_type = #tpu.core_type<tc>, window_params = [{transform_indices = @transform_0, window_bounds = array<i64: 1, 4, 24, 24>}, {transform_indices = @transform_1, window_bounds = array<i64: 1, 4, 16, 16>}]} {
    %0 = tpu.iota {dimensions = array<i32: 1>} : vector<4x24x16xi32>
    %1 = tpu.iota {dimensions = array<i32: 2>} : vector<4x24x16xi32>
    %c1_i32 = arith.constant 1 : i32
    %2 = arith.muli %arg0, %c1_i32 : i32
    %c0_i32 = arith.constant 0 : i32
    %3 = arith.addi %2, %c0_i32 : i32
    %4 = arith.index_cast %3 : i32 to index
    %5 = memref.load %arg1[%4] : memref<4xi32, #tpu.memory_space<smem>>
    %c2_i32 = arith.constant 2 : i32
    %6 = arith.addi %c2_i32, %3 : i32
    %7 = arith.index_cast %6 : i32 to index
    %8 = memref.load %arg1[%7] : memref<4xi32, #tpu.memory_space<smem>>
    %c0 = arith.constant 0 : index
    %c0_0 = arith.constant 0 : index
    %9 = arith.index_cast %5 : i32 to index
    %c0_1 = arith.constant 0 : index
    %10 = vector.load %arg2[%c0, %c0_0, %9, %c0_1] : memref<1x4x24x24xf32, #tpu.memory_space<vmem>>, vector<1x4x16x24xf32>
    %11 = vector.shape_cast %10 : vector<1x4x16x24xf32> to vector<4x16x24xf32>
    %12 = vector.broadcast %8 : i32 to vector<4x24x16xi32>
    %13 = arith.addi %1, %12 : vector<4x24x16xi32>
    %14 = arith.cmpi eq, %0, %13 : vector<4x24x16xi32>
    %cst = arith.constant 1.000000e+00 : f32
    %cst_2 = arith.constant 0.000000e+00 : f32
    %15 = vector.broadcast %cst : f32 to vector<4x24x16xf32>
    %16 = vector.broadcast %cst_2 : f32 to vector<4x24x16xf32>
    %17 = arith.select %14, %15, %16 : vector<4x24x16xi1>, vector<4x24x16xf32>
    "tpu.trace_start"() <{level = 10 : i32, message = "chy,cyw->chw"}> : () -> ()
    %cst_3 = arith.constant dense<0.000000e+00> : vector<4x16x16xf32>
    %18 = tpu.matmul %11, %17, %cst_3 {dimension_numbers = #tpu.dot_dimension_numbers<[2], [1], [1], [2], [0, 0, 0, 1, 1, 2], [0], [0]>} : vector<4x16x24xf32>, vector<4x24x16xf32>, vector<4x16x16xf32> -> vector<4x16x16xf32>
    "tpu.trace_stop"() : () -> ()
    %c0_4 = arith.constant 0 : index
    %c0_5 = arith.constant 0 : index
    %c0_6 = arith.constant 0 : index
    %c0_7 = arith.constant 0 : index
    %19 = vector.load %arg3[%c0_4, %c0_5, %c0_6, %c0_7] : memref<1x4x16x16xf32, #tpu.memory_space<vmem>>, vector<1x4x16x16xf32>
    %20 = vector.shape_cast %19 : vector<1x4x16x16xf32> to vector<4x16x16xf32>
    %21 = vector.shape_cast %18 : vector<4x16x16xf32> to vector<1x4x16x16xf32>
    tpu.vector_store %arg3[%c0_4, %c0_5, %c0_6, %c0_7], %21 {strides = array<i32>} : memref<1x4x16x16xf32, #tpu.memory_space<vmem>>, vector<1x4x16x16xf32>,
    return
  }
  func.func @transform_0(%arg0: i32, %arg1: memref<4xi32, #tpu.memory_space<smem>>) -> (i32, i32, i32, i32) {
    %c0_i32 = arith.constant 0 : i32
    %c0_i32_0 = arith.constant 0 : i32
    %c0_i32_1 = arith.constant 0 : i32
    %c0_i32_2 = arith.constant 0 : i32
    return %arg0, %c0_i32, %c0_i32_0, %c0_i32_1 : i32, i32, i32, i32
  }
  func.func @transform_1(%arg0: i32, %arg1: memref<4xi32, #tpu.memory_space<smem>>) -> (i32, i32, i32, i32) {
    %c0_i32 = arith.constant 0 : i32
    %c0_i32_0 = arith.constant 0 : i32
    %c0_i32_1 = arith.constant 0 : i32
    %c0_i32_2 = arith.constant 0 : i32
    return %arg0, %c0_i32, %c0_i32_0, %c0_i32_1 : i32, i32, i32, i32
  }
}

</mosaic_0001>

<llo_original>
// kernel: tpu_custom_call.1
$region0: #{tpu_custom_call.1}
  #allocation0 [shape = 'u32[]', space=smem, size = 0x4, offset = 0x4, fixed_abs, tag = 'smem constant byte address 0x4 - core index']
  #allocation1 [shape = 'u32[144,128]{1,0:T(1,128)}', space=vmem, size = 0x12000, scoped, tag = 'internal scratch']
  #allocation2 [shape = 's32[1]{0}', space=sflag, size = 0x4, scoped, tag = 'scoped memory for tpu_custom_call.1']
  #allocation3 [shape = 'u8[512]{0}', space=smem, size = 0x200, scoped, tag = 'prefetched SMEM operand 0']
  %s0 = inlined_call_operand.hbm [shape: s32[4], index: 0, kind: input, shape index: {}]
  %s1 = inlined_call_operand.hbm [shape: f32[2,4,24,24], index: 1, kind: input, shape index: {}]
  %s2 = inlined_call_operand.hbm [shape: f32[2,4,16,16], index: 2, kind: output, shape index: {}]
  %s3 = sld [smem:[#allocation0]]
  $region41: #{tpu_custom_call.1} parent=0
    _
  %s5 = ssub.s32 1, %s3
  %s6 = scalar_select 0, %s5, %s3
  %8 = dma.hbm_to_smem %s0, 16, [#allocation3], [#allocation2]
  %9 = dma.done [#allocation2], 16
  %10 = sfence
  $region1: #{tpu_custom_call.1} parent=0
    #allocation4 [shape = 'u8[98304]{0}', space=vmem, size = 0x18000, scoped, tag = 'input window, operand 1']
    #allocation5 [shape = 's32[2]{0}', space=sflag, size = 0x8, scoped, tag = 'scoped memory for tpu_custom_call.1']
    #allocation6 [shape = 's32[2]{0}', space=sflag, size = 0x8, scoped, tag = 'scoped memory for tpu_custom_call.1']
    #allocation7 [shape = 'u8[65536]{0}', space=vmem, size = 0x10000, scoped, tag = 'output window, operand 0']
    %11 = vsyncpa [#allocation5], 0
    %s12 = scalar_lea.sflag [#allocation5], 1
    %13 = vsyncpa %s12, 0
    %14 = vsyncpa [#allocation6], 0
    %s15 = scalar_lea.sflag [#allocation6], 1
    %16 = vsyncpa %s15, 0
    loop: start=0, step=1, limit=4
    $region2: #{tpu_custom_call.1} parent=1 // loop_pre_header
      _
    $region3: #{tpu_custom_call.1} parent=1 // loop_header
      %s18 = sphi 0, %s22
      %p19 = scmp.ge.s32.totalorder %s18, 4
      %s28 = sphi 0, %s30
      %s31 = sphi 0, %s28
      %s32 = sphi 0, %s31
      %s48 = sphi 0, %s32
      %s54 = sphi 0, %s56
      %s57 = sphi 0, %s54
      %s58 = sphi 0, %s57
      %s74 = sphi 0, %s58
    $region4: #{tpu_custom_call.1} parent=1 // loop_header_branch
      %21 = sbr.rel (%p19) target = $region8
    $region5: #{tpu_custom_call.1} parent=1 // loop_body
      %s23 = ssub.s32 %s18, 1
      %s24 = ssub.s32 %s18, 2
      %s25 = sadd.s32 %s18, 1
      %s26 = ssub.s32 %s18, %s25
      %p27 = scmp.eq.s32.totalorder %s26, 0
      %s29 = sadd.s32 %s28, 1
      %s30 = scalar_select %p27, %s28, %s29
      %p33 = pneg %p27
      %p34 = scmp.eq.s32.totalorder %s18, 1
      %p35 = por %p33, %p34
      %p36 = scmp.ne.s32.totalorder %s28, %s31
      %p37 = scmp.eq.s32.totalorder %s18, 0
      %p38 = por %p36, %p37
      %p39 = scmp.ne.s32.totalorder %s28, %s31
      %p40 = scmp.eq.s32.totalorder %s23, 1
      %p41 = por %p39, %p40
      %p42 = scmp.ne.s32.totalorder %s31, %s32
      %p43 = scmp.eq.s32.totalorder %s23, 0
      %p44 = por %p42, %p43
      %p45 = scmp.ne.s32.totalorder %s31, %s32
      %p46 = scmp.eq.s32.totalorder %s24, 1
      %p47 = por %p45, %p46
      %p49 = scmp.ne.s32.totalorder %s32, %s48
      %p50 = scmp.eq.s32.totalorder %s24, 0
      %p51 = por %p49, %p50
      %s52 = ssub.s32 %s18, %s25
      %p53 = scmp.eq.s32.totalorder %s52, 0
      %s55 = sadd.s32 %s54, 1
      %s56 = scalar_select %p53, %s54, %s55
      %p59 = pneg %p53
      %p60 = scmp.eq.s32.totalorder %s18, 1
      %p61 = por %p59, %p60
      %p62 = scmp.ne.s32.totalorder %s54, %s57
      %p63 = scmp.eq.s32.totalorder %s18, 0
      %p64 = por %p62, %p63
      %p65 = scmp.ne.s32.totalorder %s54, %s57
      %p66 = scmp.eq.s32.totalorder %s23, 1
      %p67 = por %p65, %p66
      %p68 = scmp.ne.s32.totalorder %s57, %s58
      %p69 = scmp.eq.s32.totalorder %s23, 0
      %p70 = por %p68, %p69
      %p71 = scmp.ne.s32.totalorder %s57, %s58
      %p72 = scmp.eq.s32.totalorder %s24, 1
      %p73 = por %p71, %p72
      %p75 = scmp.ne.s32.totalorder %s58, %s74
      %p76 = scmp.eq.s32.totalorder %s24, 0
      %p77 = por %p75, %p76
      %p78 = scmp.le.s32.totalorder 1, %s18
      %p79 = scmp.lt.s32.totalorder %s18, 3
      %p80 = pnand %p78, %p79
      %p81 = pneg %p80
      // Predicated region
      $region9: #{tpu_custom_call.1} parent=5 // pred_check
        _
      $region10: #{tpu_custom_call.1} parent=5 // pred_check_branch
        %83 = sbr.rel (%p80) target = $region12
      $region11: #{tpu_custom_call.1} parent=5 // pred_region
        %s84 = ssub.s32 %s18, 1
      $region12: #{tpu_custom_call.1} parent=5 // pred_fallthru
        _
      %p85 = scmp.lt.s32.totalorder %s18, 2
      // Predicated region
      $region13: #{tpu_custom_call.1} parent=5 // pred_check
        %p86 = pneg %p85
      $region14: #{tpu_custom_call.1} parent=5 // pred_check_branch
        %88 = sbr.rel (%p86) target = $region16
      $region15: #{tpu_custom_call.1} parent=5 // pred_region
        // Predicated region
        $region17: #{tpu_custom_call.1} parent=15 // pred_check
          %p89 = pneg %p38
        $region18: #{tpu_custom_call.1} parent=15 // pred_check_branch
          %91 = sbr.rel (%p89) target = $region20
        $region19: #{tpu_custom_call.1} parent=15 // pred_region
          %s92 = sand.u32 %s28, 1
          %s93 = scalar_lea.sflag [#allocation5], %s92
          %s94 = sand.u32 %s28, 1
          %s95 = smul.addr %s94, 96
          %s96 = scalar_lea.vmem [#allocation4], %s95
          %s98 = ssub.s32 1536, 1536
          %99 = vsyncadd %s93, %s98
          %s100 = smul.addr %s18, 12
          %s101 = smul.addr %s100, 128
          %s102 = scalar_lea.hbm %s1, %s101
          %s103 = sshll.u32 %s96, 4
          %s104 = int_to_ptr.vmem [resolvable:$true] %s103
          %109 = dma.hbm_to_vmem [thread:$0]  %s102, 1536, %s104, %s93, 128, 128, 8
        $region20: #{tpu_custom_call.1} parent=15 // pred_fallthru
          _
      $region16: #{tpu_custom_call.1} parent=5 // pred_fallthru
        _
      %p110 = scmp.le.s32.totalorder 1, %s18
      %p111 = scmp.lt.s32.totalorder %s18, 3
      %p112 = pnand %p110, %p111
      %p113 = pneg %p112
      // Predicated region
      $region21: #{tpu_custom_call.1} parent=5 // pred_check
        _
      $region22: #{tpu_custom_call.1} parent=5 // pred_check_branch
        %115 = sbr.rel (%p112) target = $region24
      $region23: #{tpu_custom_call.1} parent=5 // pred_region
        %s116 = ssub.s32 %s18, 1
        %s117 = sand.u32 %s31, 1
        %s118 = scalar_lea.sflag [#allocation5], %s117
        %s119 = sand.u32 %s31, 1
        %s120 = smul.addr %s119, 96
        %s121 = scalar_lea.vmem [#allocation4], %s120
        // Predicated region
        $region25: #{tpu_custom_call.1} parent=23 // pred_check
          %p122 = pneg %p44
        $region26: #{tpu_custom_call.1} parent=23 // pred_check_branch
          %124 = sbr.rel (%p122) target = $region28
        $region27: #{tpu_custom_call.1} parent=23 // pred_region
          %125 = dma.done %s118, 1536
        $region28: #{tpu_custom_call.1} parent=23 // pred_fallthru
          _
        %s126 = sand.u32 %s31, 1
        %s127 = scalar_lea.sflag [#allocation5], %s126
        %s128 = sand.u32 %s31, 1
        %s129 = smul.addr %s128, 96
        %s130 = scalar_lea.vmem [#allocation4], %s129
        %p131 = pneg %p44
        %p132 = pneg %p41
        %p133 = pneg %p70
        %p134 = pneg %p67
        %s135 = sand.u32 %s57, 1
        %s136 = scalar_lea.sflag [#allocation6], %s135
        %s137 = sand.u32 %s57, 1
        %s138 = smul.addr %s137, 64
        %s139 = scalar_lea.vmem [#allocation7], %s138
        %v140 = vlaneseq
        %v141 = vshrl.u32 %v140, 7
        %v142 = vadd.s32 %v141, 8
        %v143 = vadd.s32 %v141, 16
        %v144 = vlaneseq
        %v145 = vand.u32 %v144, 127
        %s146 = sld [smem:[#allocation3 + %s23]]
        %s147 = sadd.s32 %s23, 2
        %s148 = sld [smem:[#allocation3 + %s147]]
        %s149 = scalar_lea.vmem %s121, %s146 [#allocation4]
        %v150 = vld [vmem:[%s149] sm:$0xff]
        %v151 = vld [vmem:[%s149 + $0x8] sm:$0xff]
        %v152 = vld [vmem:[%s149 + $0x18] sm:$0xff]
        %v153 = vld [vmem:[%s149 + $0x20] sm:$0xff]
        %v154 = vld [vmem:[%s149 + $0x30] sm:$0xff]
        %v155 = vld [vmem:[%s149 + $0x38] sm:$0xff]
        %v156 = vld [vmem:[%s149 + $0x48] sm:$0xff]
        %v157 = vld [vmem:[%s149 + $0x50] sm:$0xff]
        %v158 = vstv %s148
        %v159 = vadd.s32 %v145, %v158
        %vm160 = vcmp.eq.s32.totalorder %v141, %v159
        %vm161 = vcmp.eq.s32.totalorder %v142, %v159
        %vm162 = vcmp.eq.s32.totalorder %v143, %v159
        %v163 = vsel %vm160, 1.0, 0.0
        %v164 = vsel %vm161, 1.0, 0.0
        %v165 = vsel %vm162, 1.0, 0.0
        %vm166 = vcmask 195584
        %v168 = vsel %vm166, %v150, 0
        %v171 = vsel %vm166, %v151, 0
        %173 = vmatprep.subr.mxu0 0.0
        %174 = vmatpush1.msra.mxu0 0.0
        %175 = vmatprep.subr.mxu0 0.0
        %176 = vmatpush1.msra.mxu0 0.0
        %177 = vmatprep.subr.mxu0 0.0
        %178 = vmatpush1.msra.mxu0 0.0
        %179 = vmatprep.subr.mxu0 0.0
        %180 = vmatpush1.msra.mxu0 0.0
        %181 = vmatprep.subr.mxu0 0.0
        %182 = vmatpush1.msra.mxu0 0.0
        %183 = vmatprep.subr.mxu0 0.0
        %184 = vmatpush1.msra.mxu0 0.0
        %185 = vmatprep.subr.mxu0 0.0
        %186 = vmatpush1.msra.mxu0 0.0
        %187 = vmatprep.subr.mxu0 0.0
        %188 = vmatpush1.msra.mxu0 0.0
        %189 = vmatprep.subr.mxu0 0.0
        %190 = vmatpush1.msra.mxu0 0.0
        %191 = vmatprep.subr.mxu0 0.0
        %192 = vmatpush1.msra.mxu0 0.0
        %193 = vmatprep.subr.mxu0 0.0
        %194 = vmatpush1.msra.mxu0 0.0
        %195 = vmatprep.subr.mxu0 0.0
        %196 = vmatpush1.msra.mxu0 0.0
        %197 = vmatprep.subr.mxu0 0.0
        %198 = vmatpush1.msra.mxu0 0.0
        %199 = vmatprep.subr.mxu0 0.0
        %200 = vmatpush1.msra.mxu0 %v165
        %201 = vmatprep.subr.mxu0 0.0
        %202 = vmatpush1.msra.mxu0 %v164
        %203 = vmatprep.subr.mxu0 0.0
        %204 = vmatpush1.msra.mxu0 %v163
        %205 = vmatprep.subr.mxu0 0.0
        %206 = vmatpush2.msra.mxu0 0.0
        %207 = vmatprep.subr.mxu0 0.0
        %208 = vmatpush2.msra.mxu0 0.0
        %209 = vmatprep.subr.mxu0 0.0
        %210 = vmatpush2.msra.mxu0 0.0
        %211 = vmatprep.subr.mxu0 0.0
        %212 = vmatpush2.msra.mxu0 0.0
        %213 = vmatprep.subr.mxu0 0.0
        %214 = vmatpush2.msra.mxu0 0.0
        %215 = vmatprep.subr.mxu0 0.0
        %216 = vmatpush2.msra.mxu0 0.0
        %217 = vmatprep.subr.mxu0 0.0
        %218 = vmatpush2.msra.mxu0 0.0
        %219 = vmatprep.subr.mxu0 0.0
        %220 = vmatpush2.msra.mxu0 0.0
        %221 = vmatprep.subr.mxu0 0.0
        %222 = vmatpush2.msra.mxu0 0.0
        %223 = vmatprep.subr.mxu0 0.0
        %224 = vmatpush2.msra.mxu0 0.0
        %225 = vmatprep.subr.mxu0 0.0
        %226 = vmatpush2.msra.mxu0 0.0
        %227 = vmatprep.subr.mxu0 0.0
        %228 = vmatpush2.msra.mxu0 0.0
        %229 = vmatprep.subr.mxu0 0.0
        %230 = vmatpush2.msra.mxu0 0.0
        %231 = vmatprep.subr.mxu0 0.0
        %232 = vmatpush2.msra.mxu0 0.0
        %233 = vmatprep.subr.mxu0 0.0
        %234 = vmatpush2.msra.mxu0 0.0
        %235 = vmatprep.subr.mxu0 0.0
        %236 = vmatpush2.msra.mxu0 0.0
        %237 = vmatprep.mubr.f32.mxu0 0.0
        %238 = vmatmul.mubr.f32.gmra.mxu0 %v168
        %v239 = vpop.f32.mrf.mxu0
        %v240 = vadd.f32 0.0, %v239
        %v241 = vpop.f32.mrf.mxu0
        %242 = vmatprep.mubr.f32.mxu0 0.0
        %243 = vmatmul.mubr.f32.gmra.mxu0 %v171
        %v244 = vpop.f32.mrf.mxu0
        %v245 = vadd.f32 0.0, %v244
        %v246 = vpop.f32.mrf.mxu0
        %247 = vdwg.mxu0
        %v249 = vsel %vm166, %v152, 0
        %v252 = vsel %vm166, %v153, 0
        %254 = vmatprep.subr.mxu0 0.0
        %255 = vmatpush1.msra.mxu0 0.0
        %256 = vmatprep.subr.mxu0 0.0
        %257 = vmatpush1.msra.mxu0 0.0
        %258 = vmatprep.subr.mxu0 0.0
        %259 = vmatpush1.msra.mxu0 0.0
        %260 = vmatprep.subr.mxu0 0.0
        %261 = vmatpush1.msra.mxu0 0.0
        %262 = vmatprep.subr.mxu0 0.0
        %263 = vmatpush1.msra.mxu0 0.0
        %264 = vmatprep.subr.mxu0 0.0
        %265 = vmatpush1.msra.mxu0 0.0
        %266 = vmatprep.subr.mxu0 0.0
        %267 = vmatpush1.msra.mxu0 0.0
        %268 = vmatprep.subr.mxu0 0.0
        %269 = vmatpush1.msra.mxu0 0.0
        %270 = vmatprep.subr.mxu0 0.0
        %271 = vmatpush1.msra.mxu0 0.0
        %272 = vmatprep.subr.mxu0 0.0
        %273 = vmatpush1.msra.mxu0 0.0
        %274 = vmatprep.subr.mxu0 0.0
        %275 = vmatpush1.msra.mxu0 0.0
        %276 = vmatprep.subr.mxu0 0.0
        %277 = vmatpush1.msra.mxu0 0.0
        %278 = vmatprep.subr.mxu0 0.0
        %279 = vmatpush1.msra.mxu0 0.0
        %280 = vmatprep.subr.mxu0 0.0
        %281 = vmatpush1.msra.mxu0 %v165
        %282 = vmatprep.subr.mxu0 0.0
        %283 = vmatpush1.msra.mxu0 %v164
        %284 = vmatprep.subr.mxu0 0.0
        %285 = vmatpush1.msra.mxu0 %v163
        %286 = vmatprep.subr.mxu0 0.0
        %287 = vmatpush2.msra.mxu0 0.0
        %288 = vmatprep.subr.mxu0 0.0
        %289 = vmatpush2.msra.mxu0 0.0
        %290 = vmatprep.subr.mxu0 0.0
        %291 = vmatpush2.msra.mxu0 0.0
        %292 = vmatprep.subr.mxu0 0.0
        %293 = vmatpush2.msra.mxu0 0.0
        %294 = vmatprep.subr.mxu0 0.0
        %295 = vmatpush2.msra.mxu0 0.0
        %296 = vmatprep.subr.mxu0 0.0
        %297 = vmatpush2.msra.mxu0 0.0
        %298 = vmatprep.subr.mxu0 0.0
        %299 = vmatpush2.msra.mxu0 0.0
        %300 = vmatprep.subr.mxu0 0.0
        %301 = vmatpush2.msra.mxu0 0.0
        %302 = vmatprep.subr.mxu0 0.0
        %303 = vmatpush2.msra.mxu0 0.0
        %304 = vmatprep.subr.mxu0 0.0
        %305 = vmatpush2.msra.mxu0 0.0
        %306 = vmatprep.subr.mxu0 0.0
        %307 = vmatpush2.msra.mxu0 0.0
        %308 = vmatprep.subr.mxu0 0.0
        %309 = vmatpush2.msra.mxu0 0.0
        %310 = vmatprep.subr.mxu0 0.0
        %311 = vmatpush2.msra.mxu0 0.0
        %312 = vmatprep.subr.mxu0 0.0
        %313 = vmatpush2.msra.mxu0 0.0
        %314 = vmatprep.subr.mxu0 0.0
        %315 = vmatpush2.msra.mxu0 0.0
        %316 = vmatprep.subr.mxu0 0.0
        %317 = vmatpush2.msra.mxu0 0.0
        %318 = vmatprep.mubr.f32.mxu0 0.0
        %319 = vmatmul.mubr.f32.gmra.mxu0 %v249
        %v320 = vpop.f32.mrf.mxu0
        %v321 = vadd.f32 0.0, %v320
        %v322 = vpop.f32.mrf.mxu0
        %323 = vmatprep.mubr.f32.mxu0 0.0
        %324 = vmatmul.mubr.f32.gmra.mxu0 %v252
        %v325 = vpop.f32.mrf.mxu0
        %v326 = vadd.f32 0.0, %v325
        %v327 = vpop.f32.mrf.mxu0
        %328 = vdwg.mxu0
        %v330 = vsel %vm166, %v154, 0
        %v333 = vsel %vm166, %v155, 0
        %335 = vmatprep.subr.mxu0 0.0
        %336 = vmatpush1.msra.mxu0 0.0
        %337 = vmatprep.subr.mxu0 0.0
        %338 = vmatpush1.msra.mxu0 0.0
        %339 = vmatprep.subr.mxu0 0.0
        %340 = vmatpush1.msra.mxu0 0.0
        %341 = vmatprep.subr.mxu0 0.0
        %342 = vmatpush1.msra.mxu0 0.0
        %343 = vmatprep.subr.mxu0 0.0
        %344 = vmatpush1.msra.mxu0 0.0
        %345 = vmatprep.subr.mxu0 0.0
        %346 = vmatpush1.msra.mxu0 0.0
        %347 = vmatprep.subr.mxu0 0.0
        %348 = vmatpush1.msra.mxu0 0.0
        %349 = vmatprep.subr.mxu0 0.0
        %350 = vmatpush1.msra.mxu0 0.0
        %351 = vmatprep.subr.mxu0 0.0
        %352 = vmatpush1.msra.mxu0 0.0
        %353 = vmatprep.subr.mxu0 0.0
        %354 = vmatpush1.msra.mxu0 0.0
        %355 = vmatprep.subr.mxu0 0.0
        %356 = vmatpush1.msra.mxu0 0.0
        %357 = vmatprep.subr.mxu0 0.0
        %358 = vmatpush1.msra.mxu0 0.0
        %359 = vmatprep.subr.mxu0 0.0
        %360 = vmatpush1.msra.mxu0 0.0
        %361 = vmatprep.subr.mxu0 0.0
        %362 = vmatpush1.msra.mxu0 %v165
        %363 = vmatprep.subr.mxu0 0.0
        %364 = vmatpush1.msra.mxu0 %v164
        %365 = vmatprep.subr.mxu0 0.0
        %366 = vmatpush1.msra.mxu0 %v163
        %367 = vmatprep.subr.mxu0 0.0
        %368 = vmatpush2.msra.mxu0 0.0
        %369 = vmatprep.subr.mxu0 0.0
        %370 = vmatpush2.msra.mxu0 0.0
        %371 = vmatprep.subr.mxu0 0.0
        %372 = vmatpush2.msra.mxu0 0.0
        %373 = vmatprep.subr.mxu0 0.0
        %374 = vmatpush2.msra.mxu0 0.0
        %375 = vmatprep.subr.mxu0 0.0
        %376 = vmatpush2.msra.mxu0 0.0
        %377 = vmatprep.subr.mxu0 0.0
        %378 = vmatpush2.msra.mxu0 0.0
        %379 = vmatprep.subr.mxu0 0.0
        %380 = vmatpush2.msra.mxu0 0.0
        %381 = vmatprep.subr.mxu0 0.0
        %382 = vmatpush2.msra.mxu0 0.0
        %383 = vmatprep.subr.mxu0 0.0
        %384 = vmatpush2.msra.mxu0 0.0
        %385 = vmatprep.subr.mxu0 0.0
        %386 = vmatpush2.msra.mxu0 0.0
        %387 = vmatprep.subr.mxu0 0.0
        %388 = vmatpush2.msra.mxu0 0.0
        %389 = vmatprep.subr.mxu0 0.0
        %390 = vmatpush2.msra.mxu0 0.0
        %391 = vmatprep.subr.mxu0 0.0
        %392 = vmatpush2.msra.mxu0 0.0
        %393 = vmatprep.subr.mxu0 0.0
        %394 = vmatpush2.msra.mxu0 0.0
        %395 = vmatprep.subr.mxu0 0.0
        %396 = vmatpush2.msra.mxu0 0.0
        %397 = vmatprep.subr.mxu0 0.0
        %398 = vmatpush2.msra.mxu0 0.0
        %399 = vmatprep.mubr.f32.mxu0 0.0
        %400 = vmatmul.mubr.f32.gmra.mxu0 %v330
        %v401 = vpop.f32.mrf.mxu0
        %v402 = vadd.f32 0.0, %v401
        %v403 = vpop.f32.mrf.mxu0
        %404 = vmatprep.mubr.f32.mxu0 0.0
        %405 = vmatmul.mubr.f32.gmra.mxu0 %v333
        %v406 = vpop.f32.mrf.mxu0
        %v407 = vadd.f32 0.0, %v406
        %v408 = vpop.f32.mrf.mxu0
        %409 = vdwg.mxu0
        %v411 = vsel %vm166, %v156, 0
        %v414 = vsel %vm166, %v157, 0
        %416 = vmatprep.subr.mxu0 0.0
        %417 = vmatpush1.msra.mxu0 0.0
        %418 = vmatprep.subr.mxu0 0.0
        %419 = vmatpush1.msra.mxu0 0.0
        %420 = vmatprep.subr.mxu0 0.0
        %421 = vmatpush1.msra.mxu0 0.0
        %422 = vmatprep.subr.mxu0 0.0
        %423 = vmatpush1.msra.mxu0 0.0
        %424 = vmatprep.subr.mxu0 0.0
        %425 = vmatpush1.msra.mxu0 0.0
        %426 = vmatprep.subr.mxu0 0.0
        %427 = vmatpush1.msra.mxu0 0.0
        %428 = vmatprep.subr.mxu0 0.0
        %429 = vmatpush1.msra.mxu0 0.0
        %430 = vmatprep.subr.mxu0 0.0
        %431 = vmatpush1.msra.mxu0 0.0
        %432 = vmatprep.subr.mxu0 0.0
        %433 = vmatpush1.msra.mxu0 0.0
        %434 = vmatprep.subr.mxu0 0.0
        %435 = vmatpush1.msra.mxu0 0.0
        %436 = vmatprep.subr.mxu0 0.0
        %437 = vmatpush1.msra.mxu0 0.0
        %438 = vmatprep.subr.mxu0 0.0
        %439 = vmatpush1.msra.mxu0 0.0
        %440 = vmatprep.subr.mxu0 0.0
        %441 = vmatpush1.msra.mxu0 0.0
        %442 = vmatprep.subr.mxu0 0.0
        %443 = vmatpush1.msra.mxu0 %v165
        %444 = vmatprep.subr.mxu0 0.0
        %445 = vmatpush1.msra.mxu0 %v164
        %446 = vmatprep.subr.mxu0 0.0
        %447 = vmatpush1.msra.mxu0 %v163
        %448 = vmatprep.subr.mxu0 0.0
        %449 = vmatpush2.msra.mxu0 0.0
        %450 = vmatprep.subr.mxu0 0.0
        %451 = vmatpush2.msra.mxu0 0.0
        %452 = vmatprep.subr.mxu0 0.0
        %453 = vmatpush2.msra.mxu0 0.0
        %454 = vmatprep.subr.mxu0 0.0
        %455 = vmatpush2.msra.mxu0 0.0
        %456 = vmatprep.subr.mxu0 0.0
        %457 = vmatpush2.msra.mxu0 0.0
        %458 = vmatprep.subr.mxu0 0.0
        %459 = vmatpush2.msra.mxu0 0.0
        %460 = vmatprep.subr.mxu0 0.0
        %461 = vmatpush2.msra.mxu0 0.0
        %462 = vmatprep.subr.mxu0 0.0
        %463 = vmatpush2.msra.mxu0 0.0
        %464 = vmatprep.subr.mxu0 0.0
        %465 = vmatpush2.msra.mxu0 0.0
        %466 = vmatprep.subr.mxu0 0.0
        %467 = vmatpush2.msra.mxu0 0.0
        %468 = vmatprep.subr.mxu0 0.0
        %469 = vmatpush2.msra.mxu0 0.0
        %470 = vmatprep.subr.mxu0 0.0
        %471 = vmatpush2.msra.mxu0 0.0
        %472 = vmatprep.subr.mxu0 0.0
        %473 = vmatpush2.msra.mxu0 0.0
        %474 = vmatprep.subr.mxu0 0.0
        %475 = vmatpush2.msra.mxu0 0.0
        %476 = vmatprep.subr.mxu0 0.0
        %477 = vmatpush2.msra.mxu0 0.0
        %478 = vmatprep.subr.mxu0 0.0
        %479 = vmatpush2.msra.mxu0 0.0
        %480 = vmatprep.mubr.f32.mxu0 0.0
        %481 = vmatmul.mubr.f32.gmra.mxu0 %v411
        %v482 = vpop.f32.mrf.mxu0
        %v483 = vadd.f32 0.0, %v482
        %v484 = vpop.f32.mrf.mxu0
        %485 = vmatprep.mubr.f32.mxu0 0.0
        %486 = vmatmul.mubr.f32.gmra.mxu0 %v414
        %v487 = vpop.f32.mrf.mxu0
        %v488 = vadd.f32 0.0, %v487
        %v489 = vpop.f32.mrf.mxu0
        %490 = vdwg.mxu0
        %vm491 = vcmask 130048
        %492 = vst.msk [vmem:[%s139] sm:$0xff] %vm491, %v240
        %493 = vst.msk [vmem:[%s139 + $0x8] sm:$0xff] %vm491, %v245
        %494 = vst.msk [vmem:[%s139 + $0x10] sm:$0xff] %vm491, %v321
        %495 = vst.msk [vmem:[%s139 + $0x18] sm:$0xff] %vm491, %v326
        %496 = vst.msk [vmem:[%s139 + $0x20] sm:$0xff] %vm491, %v402
        %497 = vst.msk [vmem:[%s139 + $0x28] sm:$0xff] %vm491, %v407
        %498 = vst.msk [vmem:[%s139 + $0x30] sm:$0xff] %vm491, %v483
        %499 = vst.msk [vmem:[%s139 + $0x38] sm:$0xff] %vm491, %v488
        %s500 = sand.u32 %s57, 1
        %s501 = scalar_lea.sflag [#allocation6], %s500
        %s502 = sand.u32 %s57, 1
        %s503 = smul.addr %s502, 64
        %s504 = scalar_lea.vmem [#allocation7], %s503
        // Predicated region
        $region29: #{tpu_custom_call.1} parent=23 // pred_check
          %p505 = pneg %p67
        $region30: #{tpu_custom_call.1} parent=23 // pred_check_branch
          %507 = sbr.rel (%p505) target = $region32
        $region31: #{tpu_custom_call.1} parent=23 // pred_region
          %s509 = ssub.s32 1024, 1024
          %510 = vsyncadd %s501, %s509
          %s511 = smul.addr %s23, 8
          %s512 = smul.addr %s511, 128
          %s513 = scalar_lea.hbm %s2, %s512
          %s514 = sshll.u32 %s504, 4
          %s515 = int_to_ptr.vmem [resolvable:$true] %s514
          %520 = dma.vmem_to_hbm [thread:$0]  %s515, 1024, %s513, %s501, 128, 128, 8
        $region32: #{tpu_custom_call.1} parent=23 // pred_fallthru
          _
      $region24: #{tpu_custom_call.1} parent=5 // pred_fallthru
        _
      %p521 = scmp.le.s32.totalorder 2, %s18
      // Predicated region
      $region33: #{tpu_custom_call.1} parent=5 // pred_check
        %p522 = pneg %p521
      $region34: #{tpu_custom_call.1} parent=5 // pred_check_branch
        %524 = sbr.rel (%p522) target = $region36
      $region35: #{tpu_custom_call.1} parent=5 // pred_region
        %s525 = ssub.s32 %s18, 2
        // Predicated region
        $region37: #{tpu_custom_call.1} parent=35 // pred_check
          %p526 = pneg %p73
        $region38: #{tpu_custom_call.1} parent=35 // pred_check_branch
          %528 = sbr.rel (%p526) target = $region40
        $region39: #{tpu_custom_call.1} parent=35 // pred_region
          %s529 = sand.u32 %s58, 1
          %s530 = scalar_lea.sflag [#allocation6], %s529
          %s531 = sand.u32 %s58, 1
          %s532 = smul.addr %s531, 64
          %s533 = scalar_lea.vmem [#allocation7], %s532
          %534 = dma.done %s530, 1024
        $region40: #{tpu_custom_call.1} parent=35 // pred_fallthru
          _
      $region36: #{tpu_custom_call.1} parent=5 // pred_fallthru
        _
    $region6: #{tpu_custom_call.1} parent=1 // loop_footer
      %s22 = sadd.s32 1, %s18
    $region7: #{tpu_custom_call.1} parent=1 // loop_footer_branch
      %17 = sbr.rel target = $region3
    $region8: #{tpu_custom_call.1} parent=1 // loop_exit
      _
    %535 = vsyncpa [#allocation5], 1
    %s536 = scalar_lea.sflag [#allocation5], 1
    %537 = vsyncpa %s536, 1
    %538 = vsyncpa [#allocation6], 1
    %s539 = scalar_lea.sflag [#allocation6], 1
    %540 = vsyncpa %s539, 1

</llo_original>
